<compile_context>
chip_gen: v6e
topology: v6e:2x2x1
jax: 0.10.0
libtpu: 0.0.40
codegen_flags: <defaults>
</compile_context>

<pallas_src>
import math
import numbers

import jax
import jax.numpy as jnp
from jax.experimental import pallas as pl
from jax.experimental.pallas import tpu as pltpu


# ----------------------------------------------------------------------------- weights

def gaussian_taps_1d(size, sigma):
    """Normalized 1-D Gaussian taps as plain Python floats (baked into the kernel)."""
    mean = (size - 1) / 2.0
    g = [
        math.exp(-0.5 * ((i - mean) / sigma) ** 2) / (sigma * math.sqrt(2.0 * math.pi))
        for i in range(size)
    ]
    s = sum(g)
    return tuple(t / s for t in g)


def make_gaussian_weight(channels, kernel_size, sigma, dim=2):
    """2-D grouped-conv weight (C, 1, KH, KW), mirroring GaussianSmoothing.__init__.
    Used only by the pure-JAX reference check."""
    if isinstance(kernel_size, numbers.Number):
        kernel_size = [int(kernel_size)] * dim
    if isinstance(sigma, numbers.Number):
        sigma = [float(sigma)] * dim

    grids = jnp.meshgrid(
        *[jnp.arange(s, dtype=jnp.float32) for s in kernel_size], indexing="ij"
    )
    kernel = jnp.ones((), dtype=jnp.float32)
    for size, std, mgrid in zip(kernel_size, sigma, grids):
        mean = (size - 1) / 2.0
        kernel = kernel * (
            1.0 / (std * math.sqrt(2.0 * math.pi))
            * jnp.exp(-(((mgrid - mean) / std) ** 2) / 2.0)
        )
    kernel = kernel / jnp.sum(kernel)
    kernel = kernel.reshape((1, 1) + kernel.shape)                       # (1, 1, KH, KW)
    kernel = jnp.tile(kernel, (channels,) + (1,) * (kernel.ndim - 1))    # (C, 1, KH, KW)
    return kernel


# ----------------------------------------------------------------------------- kernel

def _channel_block(C, H, W, OH, OW, itemsize):
    """Largest channel (lane) block keeping double-buffered in+out tiles inside a
    conservative per-step VMEM budget (safe on v5e/v6e/v7x default scoped limits)."""
    budget = 8 * 1024 * 1024
    per_lane = (H * W + OH * OW) * max(4, int(itemsize)) * 2   # f32 compute, x2 buffers
    max_lanes = max(128, (budget // per_lane) // 128 * 128)
    if C <= max_lanes:
        return C                     # full-extent channel block (always a legal block)
    blk = max_lanes
    while blk >= 128:                # largest 128-multiple divisor of C that fits
        if C % blk == 0:
            return blk
        blk -= 128
    return C                         # fallback: single full block


def _make_smoothing_kernel(taps_h, taps_w, OH, OW):
    KH, KW = len(taps_h), len(taps_w)

    def kernel(x_ref, o_ref):
        # x_ref: (1, H, W, Cblk)   o_ref: (1, OH, OW, Cblk)   (channels on the lane axis)
        xv = x_ref[0].astype(jnp.float32)                      # (H, W, Cblk)

        # ---- separable pass 1: KW taps along W (sublane axis; never touches lanes) ----
        ev = taps_w[0] * xv[:, 0:OW, :]
        od = None
        for kj in range(1, KW):
            t = taps_w[kj] * xv[:, kj:kj + OW, :]
            if kj & 1:
                od = t if od is None else od + t
            else:
                ev = ev + t
        tmp = ev if od is None else ev + od                    # (H, OW, Cblk)

        # ---- separable pass 2: KH taps along H (leading axis; shifts are free) ----
        ev = taps_h[0] * tmp[0:OH, :, :]
        od = None
        for ki in range(1, KH):
            t = taps_h[ki] * tmp[ki:ki + OH, :, :]
            if ki & 1:
                od = t if od is None else od + t
            else:
                ev = ev + t
        acc = ev if od is None else ev + od                    # (OH, OW, Cblk)

        o_ref[0] = acc.astype(o_ref.dtype)

    return kernel


def gaussian_smoothing_2d(x, kernel_size, sigma):
    """Depthwise (groups=channels) valid Gaussian conv2d on NCHW input via Pallas."""
    N, C, H, W = x.shape
    if isinstance(kernel_size, numbers.Number):
        kernel_size = [int(kernel_size)] * 2
    if isinstance(sigma, numbers.Number):
        sigma = [float(sigma)] * 2
    KH, KW = int(kernel_size[0]), int(kernel_size[1])
    OH, OW = H - KH + 1, W - KW + 1

    taps_h = gaussian_taps_1d(KH, float(sigma[0]))
    taps_w = gaussian_taps_1d(KW, float(sigma[1]))

    itemsize = jnp.dtype(x.dtype).itemsize
    cblk = _channel_block(C, H, W, OH, OW, itemsize)
    grid = (N, C // cblk)

    # Channels-last layout: lane axis = channels (layout plumbing, done by XLA outside).
    x_cl = jnp.transpose(x, (0, 2, 3, 1))                      # (N, H, W, C)

    kern = _make_smoothing_kernel(taps_h, taps_w, OH, OW)

    cost = pl.CostEstimate(
        flops=2 * N * C * (H * OW * KW + OH * OW * KH),        # separable tap FMAs
        transcendentals=0,
        bytes_accessed=(N * C * H * W + N * C * OH * OW) * itemsize,
    )

    out_cl = pl.pallas_call(
        kern,
        out_shape=jax.ShapeDtypeStruct((N, OH, OW, C), x.dtype),
        grid=grid,
        in_specs=[pl.BlockSpec((1, H, W, cblk), lambda n, c: (n, 0, 0, c))],
        out_specs=pl.BlockSpec((1, OH, OW, cblk), lambda n, c: (n, 0, 0, c)),
        compiler_params=pltpu.CompilerParams(
            dimension_semantics=("parallel", "parallel"),
            vmem_limit_bytes=32 * 1024 * 1024,
        ),
        cost_estimate=cost,
    )(x_cl)

    return jnp.transpose(out_cl, (0, 3, 1, 2))                 # back to NCHW


# ----------------------------------------------------------------------------- reference

def _reference(x, weight):
    """Plain JAX reference: grouped conv2d, valid padding (matches F.conv2d(groups=C))."""
    C = x.shape[1]
    return jax.lax.conv_general_dilated(
        x, weight,
        window_strides=(1, 1),
        padding="VALID",
        dimension_numbers=("NCHW", "OIHW", "NCHW"),
        feature_group_count=C,
    )


if __name__ == "__main__":
    channels = 4
    kernel_size = 5
    sigma = 1.0

    key = jax.random.PRNGKey(0)
    x = jax.random.normal(key, (2, channels, 16, 16), dtype=jnp.float32)

    out = gaussian_smoothing_2d(x, kernel_size, sigma)
    out = jax.block_until_ready(out)

    weight = make_gaussian_weight(channels, kernel_size, sigma, dim=2)
    ref = _reference(x, weight)

    assert out.shape == (2, channels, 12, 12), out.shape
    assert jnp.allclose(out, ref, atol=1e-5, rtol=1e-5), "mismatch vs conv reference"

    print("KERNEL_OK")
</pallas_src>

<mosaic_0001>
module attributes {stable_mosaic.version = 11 : i64} {
  func.func @kernel(%arg0: i32, %arg1: i32, %arg2: memref<1x16x16x4xf32, #tpu.memory_space<vmem>>, %arg3: memref<1x12x12x4xf32, #tpu.memory_space<vmem>>) attributes {dimension_semantics = [#tpu.dimension_semantics<parallel>, #tpu.dimension_semantics<parallel>], iteration_bounds = array<i64: 2, 1>, scalar_prefetch = 0 : i64, scratch_operands = 0 : i64, tpu.core_type = #tpu.core_type<tc>, window_params = [{transform_indices = @transform_0, window_bounds = array<i64: 1, 16, 16, 4>}, {transform_indices = @transform_1, window_bounds = array<i64: 1, 12, 12, 4>}]} {
    %c0 = arith.constant 0 : index
    %c0_0 = arith.constant 0 : index
    %c0_1 = arith.constant 0 : index
    %c0_2 = arith.constant 0 : index
    %0 = vector.load %arg2[%c0, %c0_0, %c0_1, %c0_2] : memref<1x16x16x4xf32, #tpu.memory_space<vmem>>, vector<1x16x16x4xf32>
    %1 = vector.shape_cast %0 : vector<1x16x16x4xf32> to vector<16x16x4xf32>
    %2 = vector.extract_strided_slice %1 {offsets = [0, 0, 0], sizes = [16, 12, 4], strides = [1, 1, 1]} : vector<16x16x4xf32> to vector<16x12x4xf32>
    %cst = arith.constant 0.054488685 : f32
    %3 = vector.broadcast %cst : f32 to vector<16x12x4xf32>
    %4 = arith.mulf %3, %2 : vector<16x12x4xf32>
    %5 = vector.extract_strided_slice %1 {offsets = [0, 1, 0], sizes = [16, 12, 4], strides = [1, 1, 1]} : vector<16x16x4xf32> to vector<16x12x4xf32>
    %cst_3 = arith.constant 0.244201347 : f32
    %6 = vector.broadcast %cst_3 : f32 to vector<16x12x4xf32>
    %7 = arith.mulf %6, %5 : vector<16x12x4xf32>
    %8 = vector.extract_strided_slice %1 {offsets = [0, 2, 0], sizes = [16, 12, 4], strides = [1, 1, 1]} : vector<16x16x4xf32> to vector<16x12x4xf32>
    %cst_4 = arith.constant 0.402619958 : f32
    %9 = vector.broadcast %cst_4 : f32 to vector<16x12x4xf32>
    %10 = arith.mulf %9, %8 : vector<16x12x4xf32>
    %11 = arith.addf %4, %10 : vector<16x12x4xf32>
    %12 = vector.extract_strided_slice %1 {offsets = [0, 3, 0], sizes = [16, 12, 4], strides = [1, 1, 1]} : vector<16x16x4xf32> to vector<16x12x4xf32>
    %cst_5 = arith.constant 0.244201347 : f32
    %13 = vector.broadcast %cst_5 : f32 to vector<16x12x4xf32>
    %14 = arith.mulf %13, %12 : vector<16x12x4xf32>
    %15 = arith.addf %7, %14 : vector<16x12x4xf32>
    %16 = vector.extract_strided_slice %1 {offsets = [0, 4, 0], sizes = [16, 12, 4], strides = [1, 1, 1]} : vector<16x16x4xf32> to vector<16x12x4xf32>
    %cst_6 = arith.constant 0.054488685 : f32
    %17 = vector.broadcast %cst_6 : f32 to vector<16x12x4xf32>
    %18 = arith.mulf %17, %16 : vector<16x12x4xf32>
    %19 = arith.addf %11, %18 : vector<16x12x4xf32>
    %20 = arith.addf %19, %15 : vector<16x12x4xf32>
    %21 = vector.extract_strided_slice %20 {offsets = [0, 0, 0], sizes = [12, 12, 4], strides = [1, 1, 1]} : vector<16x12x4xf32> to vector<12x12x4xf32>
    %cst_7 = arith.constant 0.054488685 : f32
    %22 = vector.broadcast %cst_7 : f32 to vector<12x12x4xf32>
    %23 = arith.mulf %22, %21 : vector<12x12x4xf32>
    %24 = vector.extract_strided_slice %20 {offsets = [1, 0, 0], sizes = [12, 12, 4], strides = [1, 1, 1]} : vector<16x12x4xf32> to vector<12x12x4xf32>
    %cst_8 = arith.constant 0.244201347 : f32
    %25 = vector.broadcast %cst_8 : f32 to vector<12x12x4xf32>
    %26 = arith.mulf %25, %24 : vector<12x12x4xf32>
    %27 = vector.extract_strided_slice %20 {offsets = [2, 0, 0], sizes = [12, 12, 4], strides = [1, 1, 1]} : vector<16x12x4xf32> to vector<12x12x4xf32>
    %cst_9 = arith.constant 0.402619958 : f32
    %28 = vector.broadcast %cst_9 : f32 to vector<12x12x4xf32>
    %29 = arith.mulf %28, %27 : vector<12x12x4xf32>
    %30 = arith.addf %23, %29 : vector<12x12x4xf32>
    %31 = vector.extract_strided_slice %20 {offsets = [3, 0, 0], sizes = [12, 12, 4], strides = [1, 1, 1]} : vector<16x12x4xf32> to vector<12x12x4xf32>
    %cst_10 = arith.constant 0.244201347 : f32
    %32 = vector.broadcast %cst_10 : f32 to vector<12x12x4xf32>
    %33 = arith.mulf %32, %31 : vector<12x12x4xf32>
    %34 = arith.addf %26, %33 : vector<12x12x4xf32>
    %35 = vector.extract_strided_slice %20 {offsets = [4, 0, 0], sizes = [12, 12, 4], strides = [1, 1, 1]} : vector<16x12x4xf32> to vector<12x12x4xf32>
    %cst_11 = arith.constant 0.054488685 : f32
    %36 = vector.broadcast %cst_11 : f32 to vector<12x12x4xf32>
    %37 = arith.mulf %36, %35 : vector<12x12x4xf32>
    %38 = arith.addf %30, %37 : vector<12x12x4xf32>
    %39 = arith.addf %38, %34 : vector<12x12x4xf32>
    %c0_12 = arith.constant 0 : index
    %c0_13 = arith.constant 0 : index
    %c0_14 = arith.constant 0 : index
    %c0_15 = arith.constant 0 : index
    %40 = vector.load %arg3[%c0_12, %c0_13, %c0_14, %c0_15] : memref<1x12x12x4xf32, #tpu.memory_space<vmem>>, vector<1x12x12x4xf32>
    %41 = vector.shape_cast %40 : vector<1x12x12x4xf32> to vector<12x12x4xf32>
    %42 = vector.shape_cast %39 : vector<12x12x4xf32> to vector<1x12x12x4xf32>
    tpu.vector_store %arg3[%c0_12, %c0_13, %c0_14, %c0_15], %42 {strides = array<i32>} : memref<1x12x12x4xf32, #tpu.memory_space<vmem>>, vector<1x12x12x4xf32>,
    return
  }
  func.func @transform_0(%arg0: i32, %arg1: i32) -> (i32, i32, i32, i32) {
    %c0_i32 = arith.constant 0 : i32
    %c0_i32_0 = arith.constant 0 : i32
    %c0_i32_1 = arith.constant 0 : i32
    return %arg0, %c0_i32, %c0_i32_0, %arg1 : i32, i32, i32, i32
  }
  func.func @transform_1(%arg0: i32, %arg1: i32) -> (i32, i32, i32, i32) {
    %c0_i32 = arith.constant 0 : i32
    %c0_i32_0 = arith.constant 0 : i32
    %c0_i32_1 = arith.constant 0 : i32
    return %arg0, %c0_i32, %c0_i32_0, %arg1 : i32, i32, i32, i32
  }
}

</mosaic_0001>

<llo_original>
// kernel: tpu_custom_call.1
$region0: #{tpu_custom_call.1}
  #allocation0 [shape = 'u32[]', space=smem, size = 0x4, offset = 0x4, fixed_abs, tag = 'smem constant byte address 0x4 - core index']
  #allocation1 [shape = 'u32[144,128]{1,0:T(1,128)}', space=vmem, size = 0x12000, scoped, tag = 'internal scratch']
  %s0 = inlined_call_operand.vmem [shape: f32[2,16,16,4], index: 0, kind: input, shape index: {}]
  %s1 = inlined_call_operand.vmem [shape: f32[2,12,12,4], index: 1, kind: output, shape index: {}]
  %s2 = sld [smem:[#allocation0]]
  $region37: #{tpu_custom_call.1} parent=0
    _
  %s4 = ssub.s32 1, %s2
  %s5 = scalar_select 0, %s4, %s2
  loop: start=0, step=1, limit=4
  $region2: #{tpu_custom_call.1} parent=0 // loop_pre_header
    _
  $region3: #{tpu_custom_call.1} parent=0 // loop_header
    %s7 = sphi 0, %s11
    %p8 = scmp.ge.s32.totalorder %s7, 4
    %s14 = sphi 0, %s26
    %s15 = sphi 0, %s22
    %s16 = sphi 0, %s14
    %s17 = sphi 0, %s15
    %s18 = sphi 0, %s16
    %s19 = sphi 0, %s17
    %s31 = sphi 0, %s33
    %s34 = sphi 0, %s31
    %s35 = sphi 0, %s34
    %s51 = sphi 0, %s35
    %s59 = sphi 0, %s61
    %s62 = sphi 0, %s59
    %s63 = sphi 0, %s62
    %s79 = sphi 0, %s63
  $region4: #{tpu_custom_call.1} parent=0 // loop_header_branch
    %10 = sbr.rel (%p8) target = $region8
  $region5: #{tpu_custom_call.1} parent=0 // loop_body
    %s12 = ssub.s32 %s7, 1
    %s13 = ssub.s32 %s7, 2
    %s20 = sadd.s32 1, %s15
    %p21 = scmp.ge.s32.totalorder %s20, 1
    %s22 = scalar_select %p21, 0, %s20
    %s23 = sadd.s32 1, %s14
    %s24 = scalar_select %p21, %s23, %s14
    %p25 = scmp.ge.s32.totalorder %s24, 2
    %s26 = scalar_select %p25, 0, %s24
    %s27 = ssub.s32 %s14, %s26
    %s28 = ssub.s32 %s15, %s22
    %s29 = sor.u32 %s27, %s28
    %p30 = scmp.eq.s32.totalorder %s29, 0
    %s32 = sadd.s32 %s31, 1
    %s33 = scalar_select %p30, %s31, %s32
    %p36 = pneg %p30
    %p37 = scmp.eq.s32.totalorder %s7, 1
    %p38 = por %p36, %p37
    %p39 = scmp.ne.s32.totalorder %s31, %s34
    %p40 = scmp.eq.s32.totalorder %s7, 0
    %p41 = por %p39, %p40
    %p42 = scmp.ne.s32.totalorder %s31, %s34
    %p43 = scmp.eq.s32.totalorder %s12, 1
    %p44 = por %p42, %p43
    %p45 = scmp.ne.s32.totalorder %s34, %s35
    %p46 = scmp.eq.s32.totalorder %s12, 0
    %p47 = por %p45, %p46
    %p48 = scmp.ne.s32.totalorder %s34, %s35
    %p49 = scmp.eq.s32.totalorder %s13, 1
    %p50 = por %p48, %p49
    %p52 = scmp.ne.s32.totalorder %s35, %s51
    %p53 = scmp.eq.s32.totalorder %s13, 0
    %p54 = por %p52, %p53
    %s55 = ssub.s32 %s14, %s26
    %s56 = ssub.s32 %s15, %s22
    %s57 = sor.u32 %s55, %s56
    %p58 = scmp.eq.s32.totalorder %s57, 0
    %s60 = sadd.s32 %s59, 1
    %s61 = scalar_select %p58, %s59, %s60
    %p64 = pneg %p58
    %p65 = scmp.eq.s32.totalorder %s7, 1
    %p66 = por %p64, %p65
    %p67 = scmp.ne.s32.totalorder %s59, %s62
    %p68 = scmp.eq.s32.totalorder %s7, 0
    %p69 = por %p67, %p68
    %p70 = scmp.ne.s32.totalorder %s59, %s62
    %p71 = scmp.eq.s32.totalorder %s12, 1
    %p72 = por %p70, %p71
    %p73 = scmp.ne.s32.totalorder %s62, %s63
    %p74 = scmp.eq.s32.totalorder %s12, 0
    %p75 = por %p73, %p74
    %p76 = scmp.ne.s32.totalorder %s62, %s63
    %p77 = scmp.eq.s32.totalorder %s13, 1
    %p78 = por %p76, %p77
    %p80 = scmp.ne.s32.totalorder %s63, %s79
    %p81 = scmp.eq.s32.totalorder %s13, 0
    %p82 = por %p80, %p81
    %p83 = scmp.le.s32.totalorder 1, %s7
    %p84 = scmp.lt.s32.totalorder %s7, 3
    %p85 = pnand %p83, %p84
    %p86 = pneg %p85
    // Predicated region
    $region9: #{tpu_custom_call.1} parent=5 // pred_check
      _
    $region10: #{tpu_custom_call.1} parent=5 // pred_check_branch
      %88 = sbr.rel (%p85) target = $region12
    $region11: #{tpu_custom_call.1} parent=5 // pred_region
      %s89 = ssub.s32 %s7, 1
    $region12: #{tpu_custom_call.1} parent=5 // pred_fallthru
      _
    %p90 = scmp.lt.s32.totalorder %s7, 2
    // Predicated region
    $region13: #{tpu_custom_call.1} parent=5 // pred_check
      %p91 = pneg %p90
    $region14: #{tpu_custom_call.1} parent=5 // pred_check_branch
      %93 = sbr.rel (%p91) target = $region16
    $region15: #{tpu_custom_call.1} parent=5 // pred_region
      // Predicated region
      $region17: #{tpu_custom_call.1} parent=15 // pred_check
        %p94 = pneg %p41
      $region18: #{tpu_custom_call.1} parent=15 // pred_check_branch
        %96 = sbr.rel (%p94) target = $region20
      $region19: #{tpu_custom_call.1} parent=15 // pred_region
        %p97 = scmp.lt.s32.totalorder %s14, 1
        %s98 = scalar_select %p97, %s14, 1
        %p99 = scmp.lt.s32.totalorder %s15, 0
        %s100 = scalar_select %p99, %s15, 0
        %s101 = smul.addr %s98, 32
        %s102 = sadd.s32 %s100, %s101
        %s103 = smul.addr %s102, 8
        %s104 = scalar_lea.vmem %s0, %s103
      $region20: #{tpu_custom_call.1} parent=15 // pred_fallthru
        _
    $region16: #{tpu_custom_call.1} parent=5 // pred_fallthru
      _
    %p105 = scmp.le.s32.totalorder 1, %s7
    %p106 = scmp.lt.s32.totalorder %s7, 3
    %p107 = pnand %p105, %p106
    %p108 = pneg %p107
    // Predicated region
    $region21: #{tpu_custom_call.1} parent=5 // pred_check
      _
    $region22: #{tpu_custom_call.1} parent=5 // pred_check_branch
      %110 = sbr.rel (%p107) target = $region24
    $region23: #{tpu_custom_call.1} parent=5 // pred_region
      %s111 = ssub.s32 %s7, 1
      %p112 = scmp.lt.s32.totalorder %s16, 1
      %s113 = scalar_select %p112, %s16, 1
      %p114 = scmp.lt.s32.totalorder %s17, 0
      %s115 = scalar_select %p114, %s17, 0
      %s116 = smul.addr %s113, 32
      %s117 = sadd.s32 %s115, %s116
      %s118 = smul.addr %s117, 8
      %s119 = scalar_lea.vmem %s0, %s118
      %p120 = pneg %p47
      %p121 = pneg %p44
      %p122 = pneg %p75
      %p123 = pneg %p72
      %p124 = scmp.lt.s32.totalorder %s16, 1
      %s125 = scalar_select %p124, %s16, 1
      %p126 = scmp.lt.s32.totalorder %s17, 0
      %s127 = scalar_select %p126, %s17, 0
      %s128 = smul.addr %s125, 24
      %s129 = sadd.s32 %s127, %s128
      %s130 = smul.addr %s129, 8
      %s131 = scalar_lea.vmem %s1, %s130
      %p132 = scmp.lt.s32.totalorder %s16, 1
      %s133 = scalar_select %p132, %s16, 1
      %p134 = scmp.lt.s32.totalorder %s17, 0
      %s135 = scalar_select %p134, %s17, 0
      %s136 = smul.addr %s133, 32
      %s137 = sadd.s32 %s135, %s136
      %s138 = smul.addr %s137, 8
      %s139 = scalar_lea.vmem %s0, %s138
      %p140 = scmp.lt.s32.totalorder %s16, 1
      %s141 = scalar_select %p140, %s16, 1
      %p142 = scmp.lt.s32.totalorder %s17, 0
      %s143 = scalar_select %p142, %s17, 0
      %s144 = smul.addr %s141, 24
      %s145 = sadd.s32 %s143, %s144
      %s146 = smul.addr %s145, 8
      %s147 = scalar_lea.vmem %s1, %s146
      %v148 = vld [vmem:[%s139] sm:$0xff]
      %v149 = vld [vmem:[%s139 + $0x8] sm:$0xff]
      %v150 = vld [vmem:[%s139 + $0x10] sm:$0xff]
      %v151 = vld [vmem:[%s139 + $0x18] sm:$0xff]
      %v152 = vld [vmem:[%s139 + $0x20] sm:$0xff]
      %v153 = vld [vmem:[%s139 + $0x28] sm:$0xff]
      %v154 = vld [vmem:[%s139 + $0x30] sm:$0xff]
      %v155 = vld [vmem:[%s139 + $0x38] sm:$0xff]
      %v156 = vld [vmem:[%s139 + $0x40] sm:$0xff]
      %v157 = vld [vmem:[%s139 + $0x48] sm:$0xff]
      %v158 = vld [vmem:[%s139 + $0x50] sm:$0xff]
      %v159 = vld [vmem:[%s139 + $0x58] sm:$0xff]
      %v160 = vld [vmem:[%s139 + $0x60] sm:$0xff]
      %v161 = vld [vmem:[%s139 + $0x68] sm:$0xff]
      %v162 = vld [vmem:[%s139 + $0x70] sm:$0xff]
      %v163 = vld [vmem:[%s139 + $0x78] sm:$0xff]
      %v164 = vld [vmem:[%s139 + $0x80] sm:$0xff]
      %v165 = vld [vmem:[%s139 + $0x88] sm:$0xff]
      %v166 = vld [vmem:[%s139 + $0x90] sm:$0xff]
      %v167 = vld [vmem:[%s139 + $0x98] sm:$0xff]
      %v168 = vld [vmem:[%s139 + $0xa0] sm:$0xff]
      %v169 = vld [vmem:[%s139 + $0xa8] sm:$0xff]
      %v170 = vld [vmem:[%s139 + $0xb0] sm:$0xff]
      %v171 = vld [vmem:[%s139 + $0xb8] sm:$0xff]
      %v172 = vld [vmem:[%s139 + $0xc0] sm:$0xff]
      %v173 = vld [vmem:[%s139 + $0xc8] sm:$0xff]
      %v174 = vld [vmem:[%s139 + $0xd0] sm:$0xff]
      %v175 = vld [vmem:[%s139 + $0xd8] sm:$0xff]
      %v176 = vld [vmem:[%s139 + $0xe0] sm:$0xff]
      %v177 = vld [vmem:[%s139 + $0xe8] sm:$0xff]
      %v178 = vld [vmem:[%s139 + $0xf0] sm:$0xff]
      %v179 = vld [vmem:[%s139 + $0xf8] sm:$0xff]
      %v180 = vmul.f32 %v148, 0.054488685
      %v181 = vmul.f32 %v149, 0.054488685
      %v182 = vmul.f32 %v150, 0.054488685
      %v183 = vmul.f32 %v151, 0.054488685
      %v184 = vmul.f32 %v152, 0.054488685
      %v185 = vmul.f32 %v153, 0.054488685
      %v186 = vmul.f32 %v154, 0.054488685
      %v187 = vmul.f32 %v155, 0.054488685
      %v188 = vmul.f32 %v156, 0.054488685
      %v189 = vmul.f32 %v157, 0.054488685
      %v190 = vmul.f32 %v158, 0.054488685
      %v191 = vmul.f32 %v159, 0.054488685
      %v192 = vmul.f32 %v160, 0.054488685
      %v193 = vmul.f32 %v161, 0.054488685
      %v194 = vmul.f32 %v162, 0.054488685
      %v195 = vmul.f32 %v163, 0.054488685
      %v196 = vmul.f32 %v164, 0.054488685
      %v197 = vmul.f32 %v165, 0.054488685
      %v198 = vmul.f32 %v166, 0.054488685
      %v199 = vmul.f32 %v167, 0.054488685
      %v200 = vmul.f32 %v168, 0.054488685
      %v201 = vmul.f32 %v169, 0.054488685
      %v202 = vmul.f32 %v170, 0.054488685
      %v203 = vmul.f32 %v171, 0.054488685
      %v204 = vmul.f32 %v172, 0.054488685
      %v205 = vmul.f32 %v173, 0.054488685
      %v206 = vmul.f32 %v174, 0.054488685
      %v207 = vmul.f32 %v175, 0.054488685
      %v208 = vmul.f32 %v176, 0.054488685
      %v209 = vmul.f32 %v177, 0.054488685
      %v210 = vmul.f32 %v178, 0.054488685
      %v211 = vmul.f32 %v179, 0.054488685
      %v212 = vmul.f32 %v148, 0.24420135
      %v213 = vmul.f32 %v149, 0.24420135
      %v214 = vmul.f32 %v150, 0.24420135
      %v215 = vmul.f32 %v151, 0.24420135
      %v216 = vmul.f32 %v152, 0.24420135
      %v217 = vmul.f32 %v153, 0.24420135
      %v218 = vmul.f32 %v154, 0.24420135
      %v219 = vmul.f32 %v155, 0.24420135
      %v220 = vmul.f32 %v156, 0.24420135
      %v221 = vmul.f32 %v157, 0.24420135
      %v222 = vmul.f32 %v158, 0.24420135
      %v223 = vmul.f32 %v159, 0.24420135
      %v224 = vmul.f32 %v160, 0.24420135
      %v225 = vmul.f32 %v161, 0.24420135
      %v226 = vmul.f32 %v162, 0.24420135
      %v227 = vmul.f32 %v163, 0.24420135
      %v228 = vmul.f32 %v164, 0.24420135
      %v229 = vmul.f32 %v165, 0.24420135
      %v230 = vmul.f32 %v166, 0.24420135
      %v231 = vmul.f32 %v167, 0.24420135
      %v232 = vmul.f32 %v168, 0.24420135
      %v233 = vmul.f32 %v169, 0.24420135
      %v234 = vmul.f32 %v170, 0.24420135
      %v235 = vmul.f32 %v171, 0.24420135
      %v236 = vmul.f32 %v172, 0.24420135
      %v237 = vmul.f32 %v173, 0.24420135
      %v238 = vmul.f32 %v174, 0.24420135
      %v239 = vmul.f32 %v175, 0.24420135
      %v240 = vmul.f32 %v176, 0.24420135
      %v241 = vmul.f32 %v177, 0.24420135
      %v242 = vmul.f32 %v178, 0.24420135
      %v243 = vmul.f32 %v179, 0.24420135
      %v244 = vmul.f32 %v148, 0.40261996
      %v245 = vmul.f32 %v149, 0.40261996
      %v246 = vmul.f32 %v150, 0.40261996
      %v247 = vmul.f32 %v151, 0.40261996
      %v248 = vmul.f32 %v152, 0.40261996
      %v249 = vmul.f32 %v153, 0.40261996
      %v250 = vmul.f32 %v154, 0.40261996
      %v251 = vmul.f32 %v155, 0.40261996
      %v252 = vmul.f32 %v156, 0.40261996
      %v253 = vmul.f32 %v157, 0.40261996
      %v254 = vmul.f32 %v158, 0.40261996
      %v255 = vmul.f32 %v159, 0.40261996
      %v256 = vmul.f32 %v160, 0.40261996
      %v257 = vmul.f32 %v161, 0.40261996
      %v258 = vmul.f32 %v162, 0.40261996
      %v259 = vmul.f32 %v163, 0.40261996
      %v260 = vmul.f32 %v164, 0.40261996
      %v261 = vmul.f32 %v165, 0.40261996
      %v262 = vmul.f32 %v166, 0.40261996
      %v263 = vmul.f32 %v167, 0.40261996
      %v264 = vmul.f32 %v168, 0.40261996
      %v265 = vmul.f32 %v169, 0.40261996
      %v266 = vmul.f32 %v170, 0.40261996
      %v267 = vmul.f32 %v171, 0.40261996
      %v268 = vmul.f32 %v172, 0.40261996
      %v269 = vmul.f32 %v173, 0.40261996
      %v270 = vmul.f32 %v174, 0.40261996
      %v271 = vmul.f32 %v175, 0.40261996
      %v272 = vmul.f32 %v176, 0.40261996
      %v273 = vmul.f32 %v177, 0.40261996
      %v274 = vmul.f32 %v178, 0.40261996
      %v275 = vmul.f32 %v179, 0.40261996
      %vm308 = vcmask 1045504
      %v309 = vrot.slane %v244, 2
      %v310 = vrot.slane %v245, 2
      %v311 = vsel %vm308, %v309, %v310
      %v312 = vrot.slane %v246, 2
      %v313 = vrot.slane %v247, 2
      %v314 = vsel %vm308, %v312, %v313
      %v315 = vrot.slane %v248, 2
      %v316 = vrot.slane %v249, 2
      %v317 = vsel %vm308, %v315, %v316
      %v318 = vrot.slane %v250, 2
      %v319 = vrot.slane %v251, 2
      %v320 = vsel %vm308, %v318, %v319
      %v321 = vrot.slane %v252, 2
      %v322 = vrot.slane %v253, 2
      %v323 = vsel %vm308, %v321, %v322
      %v324 = vrot.slane %v254, 2
      %v325 = vrot.slane %v255, 2
      %v326 = vsel %vm308, %v324, %v325
      %v327 = vrot.slane %v256, 2
      %v328 = vrot.slane %v257, 2
      %v329 = vsel %vm308, %v327, %v328
      %v330 = vrot.slane %v258, 2
      %v331 = vrot.slane %v259, 2
      %v332 = vsel %vm308, %v330, %v331
      %v333 = vrot.slane %v260, 2
      %v334 = vrot.slane %v261, 2
      %v335 = vsel %vm308, %v333, %v334
      %v336 = vrot.slane %v262, 2
      %v337 = vrot.slane %v263, 2
      %v338 = vsel %vm308, %v336, %v337
      %v339 = vrot.slane %v264, 2
      %v340 = vrot.slane %v265, 2
      %v341 = vsel %vm308, %v339, %v340
      %v342 = vrot.slane %v266, 2
      %v343 = vrot.slane %v267, 2
      %v344 = vsel %vm308, %v342, %v343
      %v345 = vrot.slane %v268, 2
      %v346 = vrot.slane %v269, 2
      %v347 = vsel %vm308, %v345, %v346
      %v348 = vrot.slane %v270, 2
      %v349 = vrot.slane %v271, 2
      %v350 = vsel %vm308, %v348, %v349
      %v351 = vrot.slane %v272, 2
      %v352 = vrot.slane %v273, 2
      %v353 = vsel %vm308, %v351, %v352
      %v354 = vrot.slane %v274, 2
      %v355 = vrot.slane %v275, 2
      %v356 = vsel %vm308, %v354, %v355
      %v389 = vadd.f32 %v180, %v311
      %v390 = vadd.f32 %v181, %v310
      %v391 = vadd.f32 %v182, %v314
      %v392 = vadd.f32 %v183, %v313
      %v393 = vadd.f32 %v184, %v317
      %v394 = vadd.f32 %v185, %v316
      %v395 = vadd.f32 %v186, %v320
      %v396 = vadd.f32 %v187, %v319
      %v397 = vadd.f32 %v188, %v323
      %v398 = vadd.f32 %v189, %v322
      %v399 = vadd.f32 %v190, %v326
      %v400 = vadd.f32 %v191, %v325
      %v401 = vadd.f32 %v192, %v329
      %v402 = vadd.f32 %v193, %v328
      %v403 = vadd.f32 %v194, %v332
      %v404 = vadd.f32 %v195, %v331
      %v405 = vadd.f32 %v196, %v335
      %v406 = vadd.f32 %v197, %v334
      %v407 = vadd.f32 %v198, %v338
      %v408 = vadd.f32 %v199, %v337
      %v409 = vadd.f32 %v200, %v341
      %v410 = vadd.f32 %v201, %v340
      %v411 = vadd.f32 %v202, %v344
      %v412 = vadd.f32 %v203, %v343
      %v413 = vadd.f32 %v204, %v347
      %v414 = vadd.f32 %v205, %v346
      %v415 = vadd.f32 %v206, %v350
      %v416 = vadd.f32 %v207, %v349
      %v417 = vadd.f32 %v208, %v353
      %v418 = vadd.f32 %v209, %v352
      %v419 = vadd.f32 %v210, %v356
      %v420 = vadd.f32 %v211, %v355
      %v453 = vrot.slane %v212, 2
      %v454 = vrot.slane %v213, 2
      %v455 = vsel %vm308, %v453, %v454
      %v456 = vrot.slane %v214, 2
      %v457 = vrot.slane %v215, 2
      %v458 = vsel %vm308, %v456, %v457
      %v459 = vrot.slane %v216, 2
      %v460 = vrot.slane %v217, 2
      %v461 = vsel %vm308, %v459, %v460
      %v462 = vrot.slane %v218, 2
      %v463 = vrot.slane %v219, 2
      %v464 = vsel %vm308, %v462, %v463
      %v465 = vrot.slane %v220, 2
      %v466 = vrot.slane %v221, 2
      %v467 = vsel %vm308, %v465, %v466
      %v468 = vrot.slane %v222, 2
      %v469 = vrot.slane %v223, 2
      %v470 = vsel %vm308, %v468, %v469
      %v471 = vrot.slane %v224, 2
      %v472 = vrot.slane %v225, 2
      %v473 = vsel %vm308, %v471, %v472
      %v474 = vrot.slane %v226, 2
      %v475 = vrot.slane %v227, 2
      %v476 = vsel %vm308, %v474, %v475
      %v477 = vrot.slane %v228, 2
      %v478 = vrot.slane %v229, 2
      %v479 = vsel %vm308, %v477, %v478
      %v480 = vrot.slane %v230, 2
      %v481 = vrot.slane %v231, 2
      %v482 = vsel %vm308, %v480, %v481
      %v483 = vrot.slane %v232, 2
      %v484 = vrot.slane %v233, 2
      %v485 = vsel %vm308, %v483, %v484
      %v486 = vrot.slane %v234, 2
      %v487 = vrot.slane %v235, 2
      %v488 = vsel %vm308, %v486, %v487
      %v489 = vrot.slane %v236, 2
      %v490 = vrot.slane %v237, 2
      %v491 = vsel %vm308, %v489, %v490
      %v492 = vrot.slane %v238, 2
      %v493 = vrot.slane %v239, 2
      %v494 = vsel %vm308, %v492, %v493
      %v495 = vrot.slane %v240, 2
      %v496 = vrot.slane %v241, 2
      %v497 = vsel %vm308, %v495, %v496
      %v498 = vrot.slane %v242, 2
      %v499 = vrot.slane %v243, 2
      %v500 = vsel %vm308, %v498, %v499
      %v533 = vadd.f32 %v212, %v455
      %v534 = vadd.f32 %v213, %v454
      %v535 = vadd.f32 %v214, %v458
      %v536 = vadd.f32 %v215, %v457
      %v537 = vadd.f32 %v216, %v461
      %v538 = vadd.f32 %v217, %v460
      %v539 = vadd.f32 %v218, %v464
      %v540 = vadd.f32 %v219, %v463
      %v541 = vadd.f32 %v220, %v467
      %v542 = vadd.f32 %v221, %v466
      %v543 = vadd.f32 %v222, %v470
      %v544 = vadd.f32 %v223, %v469
      %v545 = vadd.f32 %v224, %v473
      %v546 = vadd.f32 %v225, %v472
      %v547 = vadd.f32 %v226, %v476
      %v548 = vadd.f32 %v227, %v475
      %v549 = vadd.f32 %v228, %v479
      %v550 = vadd.f32 %v229, %v478
      %v551 = vadd.f32 %v230, %v482
      %v552 = vadd.f32 %v231, %v481
      %v553 = vadd.f32 %v232, %v485
      %v554 = vadd.f32 %v233, %v484
      %v555 = vadd.f32 %v234, %v488
      %v556 = vadd.f32 %v235, %v487
      %v557 = vadd.f32 %v236, %v491
      %v558 = vadd.f32 %v237, %v490
      %v559 = vadd.f32 %v238, %v494
      %v560 = vadd.f32 %v239, %v493
      %v561 = vadd.f32 %v240, %v497
      %v562 = vadd.f32 %v241, %v496
      %v563 = vadd.f32 %v242, %v500
      %v564 = vadd.f32 %v243, %v499
      %vm597 = vcmask 1043456
      %v598 = vrot.slane %v180, 4
      %v599 = vrot.slane %v181, 4
      %v600 = vsel %vm597, %v598, %v599
      %v601 = vrot.slane %v182, 4
      %v602 = vrot.slane %v183, 4
      %v603 = vsel %vm597, %v601, %v602
      %v604 = vrot.slane %v184, 4
      %v605 = vrot.slane %v185, 4
      %v606 = vsel %vm597, %v604, %v605
      %v607 = vrot.slane %v186, 4
      %v608 = vrot.slane %v187, 4
      %v609 = vsel %vm597, %v607, %v608
      %v610 = vrot.slane %v188, 4
      %v611 = vrot.slane %v189, 4
      %v612 = vsel %vm597, %v610, %v611
      %v613 = vrot.slane %v190, 4
      %v614 = vrot.slane %v191, 4
      %v615 = vsel %vm597, %v613, %v614
      %v616 = vrot.slane %v192, 4
      %v617 = vrot.slane %v193, 4
      %v618 = vsel %vm597, %v616, %v617
      %v619 = vrot.slane %v194, 4
      %v620 = vrot.slane %v195, 4
      %v621 = vsel %vm597, %v619, %v620
      %v622 = vrot.slane %v196, 4
      %v623 = vrot.slane %v197, 4
      %v624 = vsel %vm597, %v622, %v623
      %v625 = vrot.slane %v198, 4
      %v626 = vrot.slane %v199, 4
      %v627 = vsel %vm597, %v625, %v626
      %v628 = vrot.slane %v200, 4
      %v629 = vrot.slane %v201, 4
      %v630 = vsel %vm597, %v628, %v629
      %v631 = vrot.slane %v202, 4
      %v632 = vrot.slane %v203, 4
      %v633 = vsel %vm597, %v631, %v632
      %v634 = vrot.slane %v204, 4
      %v635 = vrot.slane %v205, 4
      %v636 = vsel %vm597, %v634, %v635
      %v637 = vrot.slane %v206, 4
      %v638 = vrot.slane %v207, 4
      %v639 = vsel %vm597, %v637, %v638
      %v640 = vrot.slane %v208, 4
      %v641 = vrot.slane %v209, 4
      %v642 = vsel %vm597, %v640, %v641
      %v643 = vrot.slane %v210, 4
      %v644 = vrot.slane %v211, 4
      %v645 = vsel %vm597, %v643, %v644
      %v678 = vadd.f32 %v389, %v600
      %v679 = vadd.f32 %v390, %v599
      %v680 = vadd.f32 %v391, %v603
      %v681 = vadd.f32 %v392, %v602
      %v682 = vadd.f32 %v393, %v606
      %v683 = vadd.f32 %v394, %v605
      %v684 = vadd.f32 %v395, %v609
      %v685 = vadd.f32 %v396, %v608
      %v686 = vadd.f32 %v397, %v612
      %v687 = vadd.f32 %v398, %v611
      %v688 = vadd.f32 %v399, %v615
      %v689 = vadd.f32 %v400, %v614
      %v690 = vadd.f32 %v401, %v618
      %v691 = vadd.f32 %v402, %v617
      %v692 = vadd.f32 %v403, %v621
      %v693 = vadd.f32 %v404, %v620
      %v694 = vadd.f32 %v405, %v624
      %v695 = vadd.f32 %v406, %v623
      %v696 = vadd.f32 %v407, %v627
      %v697 = vadd.f32 %v408, %v626
      %v698 = vadd.f32 %v409, %v630
      %v699 = vadd.f32 %v410, %v629
      %v700 = vadd.f32 %v411, %v633
      %v701 = vadd.f32 %v412, %v632
      %v702 = vadd.f32 %v413, %v636
      %v703 = vadd.f32 %v414, %v635
      %v704 = vadd.f32 %v415, %v639
      %v705 = vadd.f32 %v416, %v638
      %v706 = vadd.f32 %v417, %v642
      %v707 = vadd.f32 %v418, %v641
      %v708 = vadd.f32 %v419, %v645
      %v709 = vadd.f32 %v420, %v644
      %vm742 = vcmask 1046528
      %v743 = vrot.slane %v533, 1
      %v744 = vrot.slane %v534, 1
      %v745 = vsel %vm742, %v743, %v744
      %v746 = vrot.slane %v535, 1
      %v747 = vrot.slane %v536, 1
      %v748 = vsel %vm742, %v746, %v747
      %v749 = vrot.slane %v537, 1
      %v750 = vrot.slane %v538, 1
      %v751 = vsel %vm742, %v749, %v750
      %v752 = vrot.slane %v539, 1
      %v753 = vrot.slane %v540, 1
      %v754 = vsel %vm742, %v752, %v753
      %v755 = vrot.slane %v541, 1
      %v756 = vrot.slane %v542, 1
      %v757 = vsel %vm742, %v755, %v756
      %v758 = vrot.slane %v543, 1
      %v759 = vrot.slane %v544, 1
      %v760 = vsel %vm742, %v758, %v759
      %v761 = vrot.slane %v545, 1
      %v762 = vrot.slane %v546, 1
      %v763 = vsel %vm742, %v761, %v762
      %v764 = vrot.slane %v547, 1
      %v765 = vrot.slane %v548, 1
      %v766 = vsel %vm742, %v764, %v765
      %v767 = vrot.slane %v549, 1
      %v768 = vrot.slane %v550, 1
      %v769 = vsel %vm742, %v767, %v768
      %v770 = vrot.slane %v551, 1
      %v771 = vrot.slane %v552, 1
      %v772 = vsel %vm742, %v770, %v771
      %v773 = vrot.slane %v553, 1
      %v774 = vrot.slane %v554, 1
      %v775 = vsel %vm742, %v773, %v774
      %v776 = vrot.slane %v555, 1
      %v777 = vrot.slane %v556, 1
      %v778 = vsel %vm742, %v776, %v777
      %v779 = vrot.slane %v557, 1
      %v780 = vrot.slane %v558, 1
      %v781 = vsel %vm742, %v779, %v780
      %v782 = vrot.slane %v559, 1
      %v783 = vrot.slane %v560, 1
      %v784 = vsel %vm742, %v782, %v783
      %v785 = vrot.slane %v561, 1
      %v786 = vrot.slane %v562, 1
      %v787 = vsel %vm742, %v785, %v786
      %v788 = vrot.slane %v563, 1
      %v789 = vrot.slane %v564, 1
      %v790 = vsel %vm742, %v788, %v789
      %v823 = vadd.f32 %v678, %v745
      %v824 = vadd.f32 %v679, %v744
      %v825 = vadd.f32 %v680, %v748
      %v826 = vadd.f32 %v681, %v747
      %v827 = vadd.f32 %v682, %v751
      %v828 = vadd.f32 %v683, %v750
      %v829 = vadd.f32 %v684, %v754
      %v830 = vadd.f32 %v685, %v753
      %v831 = vadd.f32 %v686, %v757
      %v832 = vadd.f32 %v687, %v756
      %v833 = vadd.f32 %v688, %v760
      %v834 = vadd.f32 %v689, %v759
      %v835 = vadd.f32 %v690, %v763
      %v836 = vadd.f32 %v691, %v762
      %v837 = vadd.f32 %v692, %v766
      %v838 = vadd.f32 %v693, %v765
      %v839 = vadd.f32 %v694, %v769
      %v840 = vadd.f32 %v695, %v768
      %v841 = vadd.f32 %v696, %v772
      %v842 = vadd.f32 %v697, %v771
      %v843 = vadd.f32 %v698, %v775
      %v844 = vadd.f32 %v699, %v774
      %v845 = vadd.f32 %v700, %v778
      %v846 = vadd.f32 %v701, %v777
      %v847 = vadd.f32 %v702, %v781
      %v848 = vadd.f32 %v703, %v780
      %v849 = vadd.f32 %v704, %v784
      %v850 = vadd.f32 %v705, %v783
      %v851 = vadd.f32 %v706, %v787
      %v852 = vadd.f32 %v707, %v786
      %v853 = vadd.f32 %v708, %v790
      %v854 = vadd.f32 %v709, %v789
      %v855 = vmul.f32 %v823, 0.054488685
      %v856 = vmul.f32 %v824, 0.054488685
      %v857 = vmul.f32 %v825, 0.054488685
      %v858 = vmul.f32 %v826, 0.054488685
      %v859 = vmul.f32 %v827, 0.054488685
      %v860 = vmul.f32 %v828, 0.054488685
      %v861 = vmul.f32 %v829, 0.054488685
      %v862 = vmul.f32 %v830, 0.054488685
      %v863 = vmul.f32 %v831, 0.054488685
      %v864 = vmul.f32 %v832, 0.054488685
      %v865 = vmul.f32 %v833, 0.054488685
      %v866 = vmul.f32 %v834, 0.054488685
      %v867 = vmul.f32 %v835, 0.054488685
      %v868 = vmul.f32 %v836, 0.054488685
      %v869 = vmul.f32 %v837, 0.054488685
      %v870 = vmul.f32 %v838, 0.054488685
      %v871 = vmul.f32 %v839, 0.054488685
      %v872 = vmul.f32 %v840, 0.054488685
      %v873 = vmul.f32 %v841, 0.054488685
      %v874 = vmul.f32 %v842, 0.054488685
      %v875 = vmul.f32 %v843, 0.054488685
      %v876 = vmul.f32 %v844, 0.054488685
      %v877 = vmul.f32 %v845, 0.054488685
      %v878 = vmul.f32 %v846, 0.054488685
      %v879 = vmul.f32 %v825, 0.24420135
      %v880 = vmul.f32 %v826, 0.24420135
      %v881 = vmul.f32 %v827, 0.24420135
      %v882 = vmul.f32 %v828, 0.24420135
      %v883 = vmul.f32 %v829, 0.24420135
      %v884 = vmul.f32 %v830, 0.24420135
      %v885 = vmul.f32 %v831, 0.24420135
      %v886 = vmul.f32 %v832, 0.24420135
      %v887 = vmul.f32 %v833, 0.24420135
      %v888 = vmul.f32 %v834, 0.24420135
      %v889 = vmul.f32 %v835, 0.24420135
      %v890 = vmul.f32 %v836, 0.24420135
      %v891 = vmul.f32 %v837, 0.24420135
      %v892 = vmul.f32 %v838, 0.24420135
      %v893 = vmul.f32 %v839, 0.24420135
      %v894 = vmul.f32 %v840, 0.24420135
      %v895 = vmul.f32 %v841, 0.24420135
      %v896 = vmul.f32 %v842, 0.24420135
      %v897 = vmul.f32 %v843, 0.24420135
      %v898 = vmul.f32 %v844, 0.24420135
      %v899 = vmul.f32 %v845, 0.24420135
      %v900 = vmul.f32 %v846, 0.24420135
      %v901 = vmul.f32 %v847, 0.24420135
      %v902 = vmul.f32 %v848, 0.24420135
      %v903 = vmul.f32 %v827, 0.40261996
      %v904 = vmul.f32 %v828, 0.40261996
      %v905 = vmul.f32 %v829, 0.40261996
      %v906 = vmul.f32 %v830, 0.40261996
      %v907 = vmul.f32 %v831, 0.40261996
      %v908 = vmul.f32 %v832, 0.40261996
      %v909 = vmul.f32 %v833, 0.40261996
      %v910 = vmul.f32 %v834, 0.40261996
      %v911 = vmul.f32 %v835, 0.40261996
      %v912 = vmul.f32 %v836, 0.40261996
      %v913 = vmul.f32 %v837, 0.40261996
      %v914 = vmul.f32 %v838, 0.40261996
      %v915 = vmul.f32 %v839, 0.40261996
      %v916 = vmul.f32 %v840, 0.40261996
      %v917 = vmul.f32 %v841, 0.40261996
      %v918 = vmul.f32 %v842, 0.40261996
      %v919 = vmul.f32 %v843, 0.40261996
      %v920 = vmul.f32 %v844, 0.40261996
      %v921 = vmul.f32 %v845, 0.40261996
      %v922 = vmul.f32 %v846, 0.40261996
      %v923 = vmul.f32 %v847, 0.40261996
      %v924 = vmul.f32 %v848, 0.40261996
      %v925 = vmul.f32 %v849, 0.40261996
      %v926 = vmul.f32 %v850, 0.40261996
      %v927 = vadd.f32 %v855, %v903
      %v928 = vadd.f32 %v856, %v904
      %v929 = vadd.f32 %v857, %v905
      %v930 = vadd.f32 %v858, %v906
      %v931 = vadd.f32 %v859, %v907
      %v932 = vadd.f32 %v860, %v908
      %v933 = vadd.f32 %v861, %v909
      %v934 = vadd.f32 %v862, %v910
      %v935 = vadd.f32 %v863, %v911
      %v936 = vadd.f32 %v864, %v912
      %v937 = vadd.f32 %v865, %v913
      %v938 = vadd.f32 %v866, %v914
      %v939 = vadd.f32 %v867, %v915
      %v940 = vadd.f32 %v868, %v916
      %v941 = vadd.f32 %v869, %v917
      %v942 = vadd.f32 %v870, %v918
      %v943 = vadd.f32 %v871, %v919
      %v944 = vadd.f32 %v872, %v920
      %v945 = vadd.f32 %v873, %v921
      %v946 = vadd.f32 %v874, %v922
      %v947 = vadd.f32 %v875, %v923
      %v948 = vadd.f32 %v876, %v924
      %v949 = vadd.f32 %v877, %v925
      %v950 = vadd.f32 %v878, %v926
      %v951 = vmul.f32 %v849, 0.24420135
      %v952 = vmul.f32 %v850, 0.24420135
      %v953 = vmul.f32 %v851, 0.24420135
      %v954 = vmul.f32 %v852, 0.24420135
      %v955 = vadd.f32 %v879, %v883
      %v956 = vadd.f32 %v880, %v884
      %v957 = vadd.f32 %v881, %v885
      %v958 = vadd.f32 %v882, %v886
      %v959 = vadd.f32 %v883, %v887
      %v960 = vadd.f32 %v884, %v888
      %v961 = vadd.f32 %v885, %v889
      %v962 = vadd.f32 %v886, %v890
      %v963 = vadd.f32 %v887, %v891
      %v964 = vadd.f32 %v888, %v892
      %v965 = vadd.f32 %v889, %v893
      %v966 = vadd.f32 %v890, %v894
      %v967 = vadd.f32 %v891, %v895
      %v968 = vadd.f32 %v892, %v896
      %v969 = vadd.f32 %v893, %v897
      %v970 = vadd.f32 %v894, %v898
      %v971 = vadd.f32 %v895, %v899
      %v972 = vadd.f32 %v896, %v900
      %v973 = vadd.f32 %v897, %v901
      %v974 = vadd.f32 %v898, %v902
      %v975 = vadd.f32 %v899, %v951
      %v976 = vadd.f32 %v900, %v952
      %v977 = vadd.f32 %v901, %v953
      %v978 = vadd.f32 %v902, %v954
      %v979 = vmul.f32 %v847, 0.054488685
      %v980 = vmul.f32 %v848, 0.054488685
      %v981 = vmul.f32 %v849, 0.054488685
      %v982 = vmul.f32 %v850, 0.054488685
      %v983 = vmul.f32 %v851, 0.054488685
      %v984 = vmul.f32 %v852, 0.054488685
      %v985 = vmul.f32 %v853, 0.054488685
      %v986 = vmul.f32 %v854, 0.054488685
      %v987 = vadd.f32 %v927, %v863
      %v988 = vadd.f32 %v928, %v864
      %v989 = vadd.f32 %v929, %v865
      %v990 = vadd.f32 %v930, %v866
      %v991 = vadd.f32 %v931, %v867
      %v992 = vadd.f32 %v932, %v868
      %v993 = vadd.f32 %v933, %v869
      %v994 = vadd.f32 %v934, %v870
      %v995 = vadd.f32 %v935, %v871
      %v996 = vadd.f32 %v936, %v872
      %v997 = vadd.f32 %v937, %v873
      %v998 = vadd.f32 %v938, %v874
      %v999 = vadd.f32 %v939, %v875
      %v1000 = vadd.f32 %v940, %v876
      %v1001 = vadd.f32 %v941, %v877
      %v1002 = vadd.f32 %v942, %v878
      %v1003 = vadd.f32 %v943, %v979
      %v1004 = vadd.f32 %v944, %v980
      %v1005 = vadd.f32 %v945, %v981
      %v1006 = vadd.f32 %v946, %v982
      %v1007 = vadd.f32 %v947, %v983
      %v1008 = vadd.f32 %v948, %v984
      %v1009 = vadd.f32 %v949, %v985
      %v1010 = vadd.f32 %v950, %v986
      %v1011 = vadd.f32 %v987, %v955
      %v1012 = vadd.f32 %v988, %v956
      %v1013 = vadd.f32 %v989, %v957
      %v1014 = vadd.f32 %v990, %v958
      %v1015 = vadd.f32 %v991, %v959
      %v1016 = vadd.f32 %v992, %v960
      %v1017 = vadd.f32 %v993, %v961
      %v1018 = vadd.f32 %v994, %v962
      %v1019 = vadd.f32 %v995, %v963
      %v1020 = vadd.f32 %v996, %v964
      %v1021 = vadd.f32 %v997, %v965
      %v1022 = vadd.f32 %v998, %v966
      %v1023 = vadd.f32 %v999, %v967
      %v1024 = vadd.f32 %v1000, %v968
      %v1025 = vadd.f32 %v1001, %v969
      %v1026 = vadd.f32 %v1002, %v970
      %v1027 = vadd.f32 %v1003, %v971
      %v1028 = vadd.f32 %v1004, %v972
      %v1029 = vadd.f32 %v1005, %v973
      %v1030 = vadd.f32 %v1006, %v974
      %v1031 = vadd.f32 %v1007, %v975
      %v1032 = vadd.f32 %v1008, %v976
      %v1033 = vadd.f32 %v1009, %v977
      %v1034 = vadd.f32 %v1010, %v978
      %vm1035 = vcmask 31744
      %1036 = vst.msk [vmem:[%s147] sm:$0xff] %vm1035, %v1011
      %vm1037 = vcmask 27648
      %1038 = vst.msk [vmem:[%s147 + $0x8] sm:$0xf] %vm1037, %v1012
      %1039 = vst.msk [vmem:[%s147 + $0x10] sm:$0xff] %vm1035, %v1013
      %1040 = vst.msk [vmem:[%s147 + $0x18] sm:$0xf] %vm1037, %v1014
      %1041 = vst.msk [vmem:[%s147 + $0x20] sm:$0xff] %vm1035, %v1015
      %1042 = vst.msk [vmem:[%s147 + $0x28] sm:$0xf] %vm1037, %v1016
      %1043 = vst.msk [vmem:[%s147 + $0x30] sm:$0xff] %vm1035, %v1017
      %1044 = vst.msk [vmem:[%s147 + $0x38] sm:$0xf] %vm1037, %v1018
      %1045 = vst.msk [vmem:[%s147 + $0x40] sm:$0xff] %vm1035, %v1019
      %1046 = vst.msk [vmem:[%s147 + $0x48] sm:$0xf] %vm1037, %v1020
      %1047 = vst.msk [vmem:[%s147 + $0x50] sm:$0xff] %vm1035, %v1021
      %1048 = vst.msk [vmem:[%s147 + $0x58] sm:$0xf] %vm1037, %v1022
      %1049 = vst.msk [vmem:[%s147 + $0x60] sm:$0xff] %vm1035, %v1023
      %1050 = vst.msk [vmem:[%s147 + $0x68] sm:$0xf] %vm1037, %v1024
      %1051 = vst.msk [vmem:[%s147 + $0x70] sm:$0xff] %vm1035, %v1025
      %1052 = vst.msk [vmem:[%s147 + $0x78] sm:$0xf] %vm1037, %v1026
      %1053 = vst.msk [vmem:[%s147 + $0x80] sm:$0xff] %vm1035, %v1027
      %1054 = vst.msk [vmem:[%s147 + $0x88] sm:$0xf] %vm1037, %v1028
      %1055 = vst.msk [vmem:[%s147 + $0x90] sm:$0xff] %vm1035, %v1029
      %1056 = vst.msk [vmem:[%s147 + $0x98] sm:$0xf] %vm1037, %v1030
      %1057 = vst.msk [vmem:[%s147 + $0xa0] sm:$0xff] %vm1035, %v1031
      %1058 = vst.msk [vmem:[%s147 + $0xa8] sm:$0xf] %vm1037, %v1032
      %1059 = vst.msk [vmem:[%s147 + $0xb0] sm:$0xff] %vm1035, %v1033
      %1060 = vst.msk [vmem:[%s147 + $0xb8] sm:$0xf] %vm1037, %v1034
      %p1061 = scmp.lt.s32.totalorder %s16, 1
      %s1062 = scalar_select %p1061, %s16, 1
      %p1063 = scmp.lt.s32.totalorder %s17, 0
      %s1064 = scalar_select %p1063, %s17, 0
      %s1065 = smul.addr %s1062, 24
      %s1066 = sadd.s32 %s1064, %s1065
      %s1067 = smul.addr %s1066, 8
      %s1068 = scalar_lea.vmem %s1, %s1067
      // Predicated region
      $region25: #{tpu_custom_call.1} parent=23 // pred_check
        %p1069 = pneg %p72
      $region26: #{tpu_custom_call.1} parent=23 // pred_check_branch
        %1071 = sbr.rel (%p1069) target = $region28
      $region27: #{tpu_custom_call.1} parent=23 // pred_region
        _
      $region28: #{tpu_custom_call.1} parent=23 // pred_fallthru
        _
    $region24: #{tpu_custom_call.1} parent=5 // pred_fallthru
      _
    %p1072 = scmp.le.s32.totalorder 2, %s7
    // Predicated region
    $region29: #{tpu_custom_call.1} parent=5 // pred_check
      %p1073 = pneg %p1072
    $region30: #{tpu_custom_call.1} parent=5 // pred_check_branch
      %1075 = sbr.rel (%p1073) target = $region32
    $region31: #{tpu_custom_call.1} parent=5 // pred_region
      %s1076 = ssub.s32 %s7, 2
      // Predicated region
      $region33: #{tpu_custom_call.1} parent=31 // pred_check
        %p1077 = pneg %p78
      $region34: #{tpu_custom_call.1} parent=31 // pred_check_branch
        %1079 = sbr.rel (%p1077) target = $region36
      $region35: #{tpu_custom_call.1} parent=31 // pred_region
        %p1080 = scmp.lt.s32.totalorder %s18, 1
        %s1081 = scalar_select %p1080, %s18, 1
        %p1082 = scmp.lt.s32.totalorder %s19, 0
        %s1083 = scalar_select %p1082, %s19, 0
        %s1084 = smul.addr %s1081, 24
        %s1085 = sadd.s32 %s1083, %s1084
        %s1086 = smul.addr %s1085, 8
        %s1087 = scalar_lea.vmem %s1, %s1086
      $region36: #{tpu_custom_call.1} parent=31 // pred_fallthru
        _
    $region32: #{tpu_custom_call.1} parent=5 // pred_fallthru
      _
  $region6: #{tpu_custom_call.1} parent=0 // loop_footer
    %s11 = sadd.s32 1, %s7
  $region7: #{tpu_custom_call.1} parent=0 // loop_footer_branch
    %6 = sbr.rel target = $region3
  $region8: #{tpu_custom_call.1} parent=0 // loop_exit
    _

</llo_original>
